<compile_context>
chip_gen: v5e
topology: v5e:2x2
jax: 0.10.0
libtpu: 0.0.40
codegen_flags: <defaults>
</compile_context>

<pallas_src>
import functools

import jax
import jax.numpy as jnp
from jax.experimental import pallas as pl
from jax.experimental.pallas import tpu as pltpu


def _round_up(x, m):
    return (x + m - 1) // m * m


def _unfold_nchw(x, kernel_size, stride, padding):
    """JAX equivalent of F.unfold -> (B, C_in*k*k, OH*OW), row order (ci, kh, kw)."""
    B, C, H, W = x.shape
    k, s, p = kernel_size, stride, padding
    if p > 0:
        x = jnp.pad(x, ((0, 0), (0, 0), (p, p), (p, p)))
    OH = (H + 2 * p - k) // s + 1
    OW = (W + 2 * p - k) // s + 1
    cols = []
    for kh in range(k):
        for kw in range(k):
            cols.append(x[:, :, kh:kh + s * OH:s, kw:kw + s * OW:s])  # (B,C,OH,OW)
    patches = jnp.stack(cols, axis=2)                 # (B, C, k*k, OH, OW)
    patches = patches.reshape(B, C * k * k, OH * OW)  # (B, K, L)
    return patches, OH, OW


def _pick_kc(K):
    """Sublane-aligned K chunk with small zero-padding waste."""
    if K <= 32:
        return _round_up(K, 8)
    for cand in (32, 16):
        if _round_up(K, cand) - K <= cand // 4:
            return cand
    return 8


def _out_tiles(C_out, L, *, max_tc, max_tl):
    C_pad8 = _round_up(C_out, 8)
    tC = min(C_pad8, max_tc)                 # sublane-aligned C_out tile
    C_pad = _round_up(C_out, tC)
    L_pad128 = _round_up(L, 128)             # lane-dense loads/stores
    tL = min(max_tl, L_pad128)
    L_pad = _round_up(L_pad128, tL)
    return tC, C_pad, tL, L_pad


# --------------------------- general ("quasi") path ---------------------------

def _quasi_conv_kernel(patch_ref, e_ref, wpos_ref, wneg_ref, wzero_ref,
                       bias_ref, out_ref, *, kc, sub_l):
    """One grid step = (batch b, C_out tile c, L tile l, K chunk kb).

    patch_ref : (1, kc, tL)   unfolded patch rows for this K chunk / L tile
    e_ref     : (1, tC, kc)   exponents (K-chunk-major layout)
    wpos_ref  : (1, tC, kc)   weight                  (x > 0 case)
    wneg_ref  : (1, tC, kc)   weight * (+-1 | NaN)    (x < 0 case)
    wzero_ref : (1, tC, kc)   weight * (0 | 1 | inf)  (x == 0 case)
    bias_ref  : (tC, 128)     lane-broadcast bias
    out_ref   : (1, tC, tL)   f32 output tile, resident across the K grid axis
                              and used directly as the accumulator.
    """
    kb = pl.program_id(3)
    tc, tl = out_ref.shape[1], out_ref.shape[2]

    @pl.when(kb == 0)
    def _init():
        out_ref[0] = jnp.broadcast_to(bias_ref[:, 0:1], (tc, tl))

    for s in range(tl // sub_l):                  # lane sub-blocks bound liveness
        lo = s * sub_l
        xs = patch_ref[0, :, lo:lo + sub_l]       # (kc, sub_l) dense chunk
        is_zero = xs == 0.0
        is_pos = xs > 0.0
        # log|x| and the masks depend only on (k, l): compute once per chunk,
        # not once per (C_out, k) row.
        logp = jnp.log(jnp.where(is_zero, 1.0, jnp.abs(xs)))     # (kc, sub_l)

        acc = out_ref[0, :, lo:lo + sub_l]        # (tC, sub_l), <= ~16 vregs
        for j in range(kc):                       # short static loop over K chunk
            e_j = e_ref[0, :, j:j + 1]            # (tC, 1)
            mag = jnp.exp(e_j * logp[j:j + 1, :])                 # (tC, sub_l)
            coeff = jnp.where(is_pos[j:j + 1, :],
                              wpos_ref[0, :, j:j + 1],
                              wneg_ref[0, :, j:j + 1])            # (tC, sub_l)
            coeff = jnp.where(is_zero[j:j + 1, :],
                              wzero_ref[0, :, j:j + 1], coeff)
            acc = acc + coeff * mag
        out_ref[0, :, lo:lo + sub_l] = acc


@functools.partial(jax.jit, static_argnames=("kernel_size", "stride", "padding"))
def _custom_conv2d_quasi(x, weight, exponent, bias, *, kernel_size, stride, padding):
    f32 = jnp.float32
    B = x.shape[0]
    C_out = weight.shape[0]
    k = kernel_size

    patches, OH, OW = _unfold_nchw(x.astype(f32), k, stride, padding)  # (B,K,L)
    K, L = patches.shape[1], patches.shape[2]

    w2 = weight.reshape(C_out, K).astype(f32)
    e2 = exponent.reshape(C_out, K).astype(f32)
    b1 = bias.astype(f32)

    # Exponent-only terms (torch.pow semantics for zero / negative bases),
    # computed once on the small (C_out, K) shape and folded into the weights.
    e_round = jnp.round(e2)
    is_int = e2 == e_round
    is_odd = jnp.abs(jnp.mod(e_round, 2.0)) == 1.0
    neg_mult = jnp.where(is_int, jnp.where(is_odd, -1.0, 1.0), jnp.nan)
    zero_val = jnp.where(e2 > 0, 0.0, jnp.where(e2 == 0, 1.0, jnp.inf))
    w_pos = w2
    w_neg = w2 * neg_mult
    w_zero = w2 * zero_val

    # ---- tiling ----
    Kc = _pick_kc(K)
    K_pad = _round_up(K, Kc)
    nK = K_pad // Kc
    tC, C_pad, tL, L_pad = _out_tiles(C_out, L, max_tc=128, max_tl=1024)
    nC = C_pad // tC
    nL = L_pad // tL
    # Lane sub-block so the accumulator carried through the unrolled K-chunk
    # loop stays <= ~16 vregs (tC * sub_l <= 16K f32 elements).
    sub_l = min(tL, max(128, (16384 // tC) // 128 * 128))
    if tL % sub_l != 0:
        sub_l = 128

    # Padded K rows have patch==0 and w_zero==0 -> contribute exactly 0.
    # The zero-pad fuses with the unfold producer into one output fusion.
    # TODO(synk): in-kernel band loading would remove both the pad and the
    # k^2 unfold duplication entirely.
    patches_p = jnp.pad(patches, ((0, 0), (0, K_pad - K), (0, L_pad - L)))

    def to_kmajor(a):
        a = jnp.pad(a, ((0, C_pad - C_out), (0, K_pad - K)))
        return a.reshape(C_pad, nK, Kc).transpose(1, 0, 2)      # (nK, C_pad, Kc)

    e_km = to_kmajor(e2)
    wpos_km = to_kmajor(w_pos)
    wneg_km = to_kmajor(w_neg)
    wzero_km = to_kmajor(w_zero)
    bias_bc = jnp.broadcast_to(
        jnp.pad(b1, (0, C_pad - C_out))[:, None], (C_pad, 128))

    kernel = functools.partial(_quasi_conv_kernel, kc=Kc, sub_l=sub_l)
    param_spec = pl.BlockSpec((1, tC, Kc), lambda b, c, l, kb: (kb, c, 0))

    out = pl.pallas_call(
        kernel,
        out_shape=jax.ShapeDtypeStruct((B, C_pad, L_pad), f32),
        grid_spec=pltpu.PrefetchScalarGridSpec(
            num_scalar_prefetch=0,
            grid=(B, nC, nL, nK),
            in_specs=[
                pl.BlockSpec((1, Kc, tL), lambda b, c, l, kb: (b, kb, l)),
                param_spec, param_spec, param_spec, param_spec,
                pl.BlockSpec((tC, 128), lambda b, c, l, kb: (c, 0)),
            ],
            out_specs=pl.BlockSpec((1, tC, tL), lambda b, c, l, kb: (b, c, l)),
        ),
        compiler_params=pltpu.CompilerParams(
            dimension_semantics=("parallel", "parallel", "parallel", "arbitrary"),
            vmem_limit_bytes=32 * 1024 * 1024,
        ),
    )(patches_p, e_km, wpos_km, wneg_km, wzero_km, bias_bc)

    return out[:, :C_out, :L].reshape(B, C_out, OH, OW)


# ------------------------ exponent == 1 MXU fast path ------------------------

def _linear_conv_kernel(patch_ref, w_ref, bias_ref, out_ref):
    """All exponents == 1  =>  out = W @ patches + bias (plain conv on the MXU).

    patch_ref : (1, Kc, tL)   w_ref : (tC, Kc)   bias_ref : (tC, 128)
    out_ref   : (1, tC, tL)   f32, resident across the K grid axis (accumulator)
    """
    kb = pl.program_id(3)
    tc, tl = out_ref.shape[1], out_ref.shape[2]

    @pl.when(kb == 0)
    def _init():
        out_ref[0] = jnp.broadcast_to(bias_ref[:, 0:1], (tc, tl))

    out_ref[0] += jnp.dot(w_ref[...], patch_ref[0],
                          preferred_element_type=jnp.float32,
                          precision=jax.lax.Precision.HIGHEST)


@functools.partial(jax.jit, static_argnames=("kernel_size", "stride", "padding"))
def _custom_conv2d_linear(x, weight, bias, *, kernel_size, stride, padding):
    f32 = jnp.float32
    B = x.shape[0]
    C_out = weight.shape[0]
    k = kernel_size

    patches, OH, OW = _unfold_nchw(x.astype(f32), k, stride, padding)  # (B,K,L)
    K, L = patches.shape[1], patches.shape[2]
    w2 = weight.reshape(C_out, K).astype(f32)
    b1 = bias.astype(f32)

    tC, C_pad, tL, L_pad = _out_tiles(C_out, L, max_tc=256, max_tl=1024)
    Kc = _round_up(K, 8) if K <= 512 else 512        # full-dim or 128-multiple
    K_pad = _round_up(K, Kc)
    nK = K_pad // Kc
    nC = C_pad // tC
    nL = L_pad // tL

    patches_p = jnp.pad(patches, ((0, 0), (0, K_pad - K), (0, L_pad - L)))
    w2p = jnp.pad(w2, ((0, C_pad - C_out), (0, K_pad - K)))
    bias_bc = jnp.broadcast_to(
        jnp.pad(b1, (0, C_pad - C_out))[:, None], (C_pad, 128))

    out = pl.pallas_call(
        _linear_conv_kernel,
        out_shape=jax.ShapeDtypeStruct((B, C_pad, L_pad), f32),
        grid_spec=pltpu.PrefetchScalarGridSpec(
            num_scalar_prefetch=0,
            grid=(B, nC, nL, nK),
            in_specs=[
                pl.BlockSpec((1, Kc, tL), lambda b, c, l, kb: (b, kb, l)),
                pl.BlockSpec((tC, Kc), lambda b, c, l, kb: (c, kb)),
                pl.BlockSpec((tC, 128), lambda b, c, l, kb: (c, 0)),
            ],
            out_specs=pl.BlockSpec((1, tC, tL), lambda b, c, l, kb: (b, c, l)),
        ),
        compiler_params=pltpu.CompilerParams(
            dimension_semantics=("parallel", "parallel", "parallel", "arbitrary"),
            vmem_limit_bytes=32 * 1024 * 1024,
        ),
    )(patches_p, w2p, bias_bc)

    return out[:, :C_out, :L].reshape(B, C_out, OH, OW)


# --------------------------------- dispatch ----------------------------------

def custom_conv2d(x, weight, exponent, bias, *, kernel_size, stride, padding):
    """x: (B, C_in, H, W) NCHW; returns (B, C_out, OH, OW) float32."""
    if bias is None:
        bias = jnp.zeros((weight.shape[0],), jnp.float32)
    # Dispatch outside jit: the module's init state (exponent == 1) is an
    # ordinary convolution -> MXU matmul, avoiding one EUP exp per output elem.
    if bool(jnp.all(exponent == 1.0)):
        return _custom_conv2d_linear(x, weight, bias, kernel_size=kernel_size,
                                     stride=stride, padding=padding)
    return _custom_conv2d_quasi(x, weight, exponent, bias, kernel_size=kernel_size,
                                stride=stride, padding=padding)


# ---------------------------- pure-JAX reference ----------------------------

def _torch_like_pow(x, e):
    ax = jnp.abs(x)
    safe_ax = jnp.where(ax > 0, ax, 1.0)
    mag = jnp.exp(e * jnp.log(safe_ax))
    e_round = jnp.round(e)
    is_int = e == e_round
    is_odd = jnp.abs(jnp.mod(e_round, 2.0)) == 1.0
    sign = jnp.where(is_odd, -1.0, 1.0)
    neg_case = jnp.where(is_int, sign * mag, jnp.nan)
    zero_case = jnp.where(e > 0, 0.0, jnp.where(e == 0, 1.0, jnp.inf))
    return jnp.where(x > 0, mag, jnp.where(x == 0, zero_case, neg_case))


def _reference(x, weight, exponent, bias, *, kernel_size, stride, padding):
    patches, OH, OW = _unfold_nchw(x, kernel_size, stride, padding)   # (B, K, L)
    B, K, L = patches.shape
    C_out = weight.shape[0]
    w2 = weight.reshape(C_out, K)
    e2 = exponent.reshape(C_out, K)
    x_exp = _torch_like_pow(patches[:, None, :, :], e2[None, :, :, None])
    out = jnp.sum(x_exp * w2[None, :, :, None], axis=2)               # (B, C_out, L)
    out = out + bias[None, :, None]
    return out.reshape(B, C_out, OH, OW)


if __name__ == "__main__":
    B, C_in, H, W = 2, 4, 16, 16
    C_out, k, stride, padding = 8, 3, 1, 1

    key = jax.random.PRNGKey(0)
    kx, kw, kbias, ke = jax.random.split(key, 4)
    x = jax.random.normal(kx, (B, C_in, H, W), dtype=jnp.float32)
    weight = jax.random.normal(kw, (C_out, C_in, k, k), dtype=jnp.float32)
    bias = jax.random.normal(kbias, (C_out,), dtype=jnp.float32)

    # (1) module's init state (exponent == 1) -> MXU fast path, and
    # (2) non-trivial integer exponents exercising the odd/even/negative-base
    #     and zero-base paths -> general EUP path.
    exponent1 = jnp.ones((C_out, C_in, k, k), dtype=jnp.float32)
    exponent2 = jax.random.randint(
        ke, (C_out, C_in, k, k), 0, 3).astype(jnp.float32) + 1.0

    for exponent in (exponent1, exponent2):
        out = custom_conv2d(x, weight, exponent, bias,
                            kernel_size=k, stride=stride, padding=padding)
        out = jax.block_until_ready(out)
        ref = _reference(x, weight, exponent, bias,
                         kernel_size=k, stride=stride, padding=padding)
        assert out.shape == (B, C_out, H, W), out.shape
        assert bool(jnp.allclose(out, ref, atol=1e-4, rtol=1e-4)), \
            "mismatch vs reference"

    print("KERNEL_OK")
</pallas_src>

<mosaic_0001>
module attributes {stable_mosaic.version = 11 : i64} {
  func.func @_linear_conv_kernel(%arg0: i32, %arg1: i32, %arg2: i32, %arg3: i32, %arg4: memref<1x40x256xf32, #tpu.memory_space<vmem>>, %arg5: memref<8x40xf32, #tpu.memory_space<vmem>>, %arg6: memref<8x128xf32, #tpu.memory_space<vmem>>, %arg7: memref<1x8x256xf32, #tpu.memory_space<vmem>>) attributes {dimension_semantics = [#tpu.dimension_semantics<parallel>, #tpu.dimension_semantics<parallel>, #tpu.dimension_semantics<parallel>, #tpu.dimension_semantics<arbitrary>], iteration_bounds = array<i64: 2, 1, 1, 1>, scalar_prefetch = 0 : i64, scratch_operands = 0 : i64, tpu.core_type = #tpu.core_type<tc>, window_params = [{transform_indices = @transform_0, window_bounds = array<i64: 1, 40, 256>}, {transform_indices = @transform_1, window_bounds = array<i64: 8, 40>}, {transform_indices = @transform_2, window_bounds = array<i64: 8, 128>}, {transform_indices = @transform_3, window_bounds = array<i64: 1, 8, 256>}]} {
    %c0_i32 = arith.constant 0 : i32
    %0 = arith.cmpi eq, %arg3, %c0_i32 : i32
    %1 = arith.extui %0 : i1 to i32
    %c0_i32_0 = arith.constant 0 : i32
    %2 = arith.cmpi ne, %1, %c0_i32_0 : i32
    scf.if %2 {
      %c0_11 = arith.constant 0 : index
      %c0_12 = arith.constant 0 : index
      %13 = vector.load %arg6[%c0_11, %c0_12] : memref<8x128xf32, #tpu.memory_space<vmem>>, vector<8x1xf32>
      %14 = vector.shape_cast %13 : vector<8x1xf32> to vector<8x1xf32>
      %15 = vector.broadcast %14 : vector<8x1xf32> to vector<8x256xf32>
      %c0_13 = arith.constant 0 : index
      %c0_14 = arith.constant 0 : index
      %c0_15 = arith.constant 0 : index
      %16 = vector.load %arg7[%c0_13, %c0_14, %c0_15] : memref<1x8x256xf32, #tpu.memory_space<vmem>>, vector<1x8x256xf32>
      %17 = vector.shape_cast %16 : vector<1x8x256xf32> to vector<8x256xf32>
      %18 = vector.shape_cast %15 : vector<8x256xf32> to vector<1x8x256xf32>
      tpu.vector_store %arg7[%c0_13, %c0_14, %c0_15], %18 {strides = array<i32>} : memref<1x8x256xf32, #tpu.memory_space<vmem>>, vector<1x8x256xf32>,
    } else {
    }
    %c0 = arith.constant 0 : index
    %c0_1 = arith.constant 0 : index
    %c0_2 = arith.constant 0 : index
    %3 = vector.load %arg7[%c0, %c0_1, %c0_2] : memref<1x8x256xf32, #tpu.memory_space<vmem>>, vector<1x8x256xf32>
    %4 = vector.shape_cast %3 : vector<1x8x256xf32> to vector<8x256xf32>
    %c0_3 = arith.constant 0 : index
    %c0_4 = arith.constant 0 : index
    %5 = vector.load %arg5[%c0_3, %c0_4] : memref<8x40xf32, #tpu.memory_space<vmem>>, vector<8x40xf32>
    %c0_5 = arith.constant 0 : index
    %c0_6 = arith.constant 0 : index
    %c0_7 = arith.constant 0 : index
    %6 = vector.load %arg4[%c0_5, %c0_6, %c0_7] : memref<1x40x256xf32, #tpu.memory_space<vmem>>, vector<1x40x256xf32>
    %7 = vector.shape_cast %6 : vector<1x40x256xf32> to vector<40x256xf32>
    %cst = arith.constant dense<0.000000e+00> : vector<8x256xf32>
    %8 = tpu.matmul %5, %7, %cst {dimension_numbers = #tpu.dot_dimension_numbers<[1], [0], [0], [1], [0, 0, 1, 1], [], []>, precision = #tpu.contract_precision<fp32>} : vector<8x40xf32>, vector<40x256xf32>, vector<8x256xf32> -> vector<8x256xf32>
    %9 = arith.addf %4, %8 : vector<8x256xf32>
    %c0_8 = arith.constant 0 : index
    %c0_9 = arith.constant 0 : index
    %c0_10 = arith.constant 0 : index
    %10 = vector.load %arg7[%c0_8, %c0_9, %c0_10] : memref<1x8x256xf32, #tpu.memory_space<vmem>>, vector<1x8x256xf32>
    %11 = vector.shape_cast %10 : vector<1x8x256xf32> to vector<8x256xf32>
    %12 = vector.shape_cast %9 : vector<8x256xf32> to vector<1x8x256xf32>
    tpu.vector_store %arg7[%c0_8, %c0_9, %c0_10], %12 {strides = array<i32>} : memref<1x8x256xf32, #tpu.memory_space<vmem>>, vector<1x8x256xf32>,
    return
  }
  func.func @transform_0(%arg0: i32, %arg1: i32, %arg2: i32, %arg3: i32) -> (i32, i32, i32) {
    %c0_i32 = arith.constant 0 : i32
    return %arg0, %arg3, %arg2 : i32, i32, i32
  }
  func.func @transform_1(%arg0: i32, %arg1: i32, %arg2: i32, %arg3: i32) -> (i32, i32) {
    %c0_i32 = arith.constant 0 : i32
    return %arg1, %arg3 : i32, i32
  }
  func.func @transform_2(%arg0: i32, %arg1: i32, %arg2: i32, %arg3: i32) -> (i32, i32) {
    %c0_i32 = arith.constant 0 : i32
    %c0_i32_0 = arith.constant 0 : i32
    return %arg1, %c0_i32 : i32, i32
  }
  func.func @transform_3(%arg0: i32, %arg1: i32, %arg2: i32, %arg3: i32) -> (i32, i32, i32) {
    %c0_i32 = arith.constant 0 : i32
    return %arg0, %arg1, %arg2 : i32, i32, i32
  }
}

</mosaic_0001>

<llo_original>
// kernel: _custom_conv2d_linear.1
$region0: #{_custom_conv2d_linear.1}
  #allocation0 [shape = 'u32[]', space=smem, size = 0x4, offset = 0x4, fixed_abs, tag = 'smem constant byte address 0x4 - core index']
  #allocation1 [shape = 'u32[72,128]{1,0:T(1,128)}', space=vmem, size = 0x9000, scoped, tag = 'internal scratch']
  %s0 = inlined_call_operand.vmem [shape: f32[2,40,256], index: 0, kind: input, shape index: {}]
  %s1 = inlined_call_operand.vmem [shape: f32[8,40], index: 1, kind: input, shape index: {}]
  %s2 = inlined_call_operand.vmem [shape: f32[8,128], index: 2, kind: input, shape index: {}]
  %s3 = inlined_call_operand.vmem [shape: f32[2,8,256], index: 3, kind: output, shape index: {}]
  %s4 = sld [smem:[#allocation0]]
  $region49: #{_custom_conv2d_linear.1} parent=0
    _
  %s6 = ssub.s32 1, %s4
  %s7 = scalar_select 0, %s6, %s4
  loop: start=0, step=1, limit=4
  $region2: #{_custom_conv2d_linear.1} parent=0 // loop_pre_header
    _
  $region3: #{_custom_conv2d_linear.1} parent=0 // loop_header
    %s9 = sphi 0, %s13
    %p10 = scmp.ge.s32.totalorder %s9, 4
    %s16 = sphi 0, %s42
    %s17 = sphi 0, %s38
    %s18 = sphi 0, %s34
    %s19 = sphi 0, %s30
    %s20 = sphi 0, %s16
    %s21 = sphi 0, %s17
    %s22 = sphi 0, %s18
    %s23 = sphi 0, %s19
    %s24 = sphi 0, %s20
    %s25 = sphi 0, %s21
    %s26 = sphi 0, %s22
    %s27 = sphi 0, %s23
    %s49 = sphi 0, %s51
    %s52 = sphi 0, %s49
    %s53 = sphi 0, %s52
    %s69 = sphi 0, %s53
    %s77 = sphi 0, %s79
    %s80 = sphi 0, %s77
    %s81 = sphi 0, %s80
    %s97 = sphi 0, %s81
    %s103 = sphi 0, %s105
    %s106 = sphi 0, %s103
    %s107 = sphi 0, %s106
    %s123 = sphi 0, %s107
    %s133 = sphi 0, %s135
    %s136 = sphi 0, %s133
    %s137 = sphi 0, %s136
    %s153 = sphi 0, %s137
  $region4: #{_custom_conv2d_linear.1} parent=0 // loop_header_branch
    %12 = sbr.rel (%p10) target = $region8
  $region5: #{_custom_conv2d_linear.1} parent=0 // loop_body
    %s14 = ssub.s32 %s9, 1
    %s15 = ssub.s32 %s9, 2
    %s28 = sadd.s32 1, %s19
    %p29 = scmp.ge.s32.totalorder %s28, 1
    %s30 = scalar_select %p29, 0, %s28
    %s31 = sadd.s32 1, %s18
    %s32 = scalar_select %p29, %s31, %s18
    %p33 = scmp.ge.s32.totalorder %s32, 1
    %s34 = scalar_select %p33, 0, %s32
    %s35 = sadd.s32 1, %s17
    %s36 = scalar_select %p33, %s35, %s17
    %p37 = scmp.ge.s32.totalorder %s36, 1
    %s38 = scalar_select %p37, 0, %s36
    %s39 = sadd.s32 1, %s16
    %s40 = scalar_select %p37, %s39, %s16
    %p41 = scmp.ge.s32.totalorder %s40, 2
    %s42 = scalar_select %p41, 0, %s40
    %s43 = ssub.s32 %s16, %s42
    %s44 = ssub.s32 %s19, %s30
    %s45 = sor.u32 %s43, %s44
    %s46 = ssub.s32 %s18, %s34
    %s47 = sor.u32 %s45, %s46
    %p48 = scmp.eq.s32.totalorder %s47, 0
    %s50 = sadd.s32 %s49, 1
    %s51 = scalar_select %p48, %s49, %s50
    %p54 = pneg %p48
    %p55 = scmp.eq.s32.totalorder %s9, 1
    %p56 = por %p54, %p55
    %p57 = scmp.ne.s32.totalorder %s49, %s52
    %p58 = scmp.eq.s32.totalorder %s9, 0
    %p59 = por %p57, %p58
    %p60 = scmp.ne.s32.totalorder %s49, %s52
    %p61 = scmp.eq.s32.totalorder %s14, 1
    %p62 = por %p60, %p61
    %p63 = scmp.ne.s32.totalorder %s52, %s53
    %p64 = scmp.eq.s32.totalorder %s14, 0
    %p65 = por %p63, %p64
    %p66 = scmp.ne.s32.totalorder %s52, %s53
    %p67 = scmp.eq.s32.totalorder %s15, 1
    %p68 = por %p66, %p67
    %p70 = scmp.ne.s32.totalorder %s53, %s69
    %p71 = scmp.eq.s32.totalorder %s15, 0
    %p72 = por %p70, %p71
    %s73 = ssub.s32 %s17, %s38
    %s74 = ssub.s32 %s19, %s30
    %s75 = sor.u32 %s73, %s74
    %p76 = scmp.eq.s32.totalorder %s75, 0
    %s78 = sadd.s32 %s77, 1
    %s79 = scalar_select %p76, %s77, %s78
    %p82 = pneg %p76
    %p83 = scmp.eq.s32.totalorder %s9, 1
    %p84 = por %p82, %p83
    %p85 = scmp.ne.s32.totalorder %s77, %s80
    %p86 = scmp.eq.s32.totalorder %s9, 0
    %p87 = por %p85, %p86
    %p88 = scmp.ne.s32.totalorder %s77, %s80
    %p89 = scmp.eq.s32.totalorder %s14, 1
    %p90 = por %p88, %p89
    %p91 = scmp.ne.s32.totalorder %s80, %s81
    %p92 = scmp.eq.s32.totalorder %s14, 0
    %p93 = por %p91, %p92
    %p94 = scmp.ne.s32.totalorder %s80, %s81
    %p95 = scmp.eq.s32.totalorder %s15, 1
    %p96 = por %p94, %p95
    %p98 = scmp.ne.s32.totalorder %s81, %s97
    %p99 = scmp.eq.s32.totalorder %s15, 0
    %p100 = por %p98, %p99
    %s101 = ssub.s32 %s17, %s38
    %p102 = scmp.eq.s32.totalorder %s101, 0
    %s104 = sadd.s32 %s103, 1
    %s105 = scalar_select %p102, %s103, %s104
    %p108 = pneg %p102
    %p109 = scmp.eq.s32.totalorder %s9, 1
    %p110 = por %p108, %p109
    %p111 = scmp.ne.s32.totalorder %s103, %s106
    %p112 = scmp.eq.s32.totalorder %s9, 0
    %p113 = por %p111, %p112
    %p114 = scmp.ne.s32.totalorder %s103, %s106
    %p115 = scmp.eq.s32.totalorder %s14, 1
    %p116 = por %p114, %p115
    %p117 = scmp.ne.s32.totalorder %s106, %s107
    %p118 = scmp.eq.s32.totalorder %s14, 0
    %p119 = por %p117, %p118
    %p120 = scmp.ne.s32.totalorder %s106, %s107
    %p121 = scmp.eq.s32.totalorder %s15, 1
    %p122 = por %p120, %p121
    %p124 = scmp.ne.s32.totalorder %s107, %s123
    %p125 = scmp.eq.s32.totalorder %s15, 0
    %p126 = por %p124, %p125
    %s127 = ssub.s32 %s16, %s42
    %s128 = ssub.s32 %s17, %s38
    %s129 = sor.u32 %s127, %s128
    %s130 = ssub.s32 %s18, %s34
    %s131 = sor.u32 %s129, %s130
    %p132 = scmp.eq.s32.totalorder %s131, 0
    %s134 = sadd.s32 %s133, 1
    %s135 = scalar_select %p132, %s133, %s134
    %p138 = pneg %p132
    %p139 = scmp.eq.s32.totalorder %s9, 1
    %p140 = por %p138, %p139
    %p141 = scmp.ne.s32.totalorder %s133, %s136
    %p142 = scmp.eq.s32.totalorder %s9, 0
    %p143 = por %p141, %p142
    %p144 = scmp.ne.s32.totalorder %s133, %s136
    %p145 = scmp.eq.s32.totalorder %s14, 1
    %p146 = por %p144, %p145
    %p147 = scmp.ne.s32.totalorder %s136, %s137
    %p148 = scmp.eq.s32.totalorder %s14, 0
    %p149 = por %p147, %p148
    %p150 = scmp.ne.s32.totalorder %s136, %s137
    %p151 = scmp.eq.s32.totalorder %s15, 1
    %p152 = por %p150, %p151
    %p154 = scmp.ne.s32.totalorder %s137, %s153
    %p155 = scmp.eq.s32.totalorder %s15, 0
    %p156 = por %p154, %p155
    %p157 = scmp.le.s32.totalorder 1, %s9
    %p158 = scmp.lt.s32.totalorder %s9, 3
    %p159 = pnand %p157, %p158
    %p160 = pneg %p159
    // Predicated region
    $region9: #{_custom_conv2d_linear.1} parent=5 // pred_check
      _
    $region10: #{_custom_conv2d_linear.1} parent=5 // pred_check_branch
      %162 = sbr.rel (%p159) target = $region12
    $region11: #{_custom_conv2d_linear.1} parent=5 // pred_region
      %s163 = ssub.s32 %s9, 1
      // Predicated region
      $region13: #{_custom_conv2d_linear.1} parent=11 // pred_check
        %p164 = pneg %p93
      $region14: #{_custom_conv2d_linear.1} parent=11 // pred_check_branch
        %166 = sbr.rel (%p164) target = $region16
      $region15: #{_custom_conv2d_linear.1} parent=11 // pred_region
        %p167 = scmp.lt.s32.totalorder %s21, 0
        %s168 = scalar_select %p167, %s21, 0
        %p169 = scmp.lt.s32.totalorder %s23, 0
        %s170 = scalar_select %p169, %s23, 0
        %s171 = sadd.s32 %s170, %s168
        %s172 = smul.addr %s171, 8
        %s173 = scalar_lea.vmem %s1, %s172
      $region16: #{_custom_conv2d_linear.1} parent=11 // pred_fallthru
        _
      // Predicated region
      $region17: #{_custom_conv2d_linear.1} parent=11 // pred_check
        %p174 = pneg %p119
      $region18: #{_custom_conv2d_linear.1} parent=11 // pred_check_branch
        %176 = sbr.rel (%p174) target = $region20
      $region19: #{_custom_conv2d_linear.1} parent=11 // pred_region
        %p177 = scmp.lt.s32.totalorder %s21, 0
        %s178 = scalar_select %p177, %s21, 0
        %s179 = smul.addr %s178, 8
        %s180 = scalar_lea.vmem %s2, %s179
      $region20: #{_custom_conv2d_linear.1} parent=11 // pred_fallthru
        _
    $region12: #{_custom_conv2d_linear.1} parent=5 // pred_fallthru
      _
    %p181 = scmp.lt.s32.totalorder %s9, 2
    // Predicated region
    $region21: #{_custom_conv2d_linear.1} parent=5 // pred_check
      %p182 = pneg %p181
    $region22: #{_custom_conv2d_linear.1} parent=5 // pred_check_branch
      %184 = sbr.rel (%p182) target = $region24
    $region23: #{_custom_conv2d_linear.1} parent=5 // pred_region
      // Predicated region
      $region25: #{_custom_conv2d_linear.1} parent=23 // pred_check
        %p185 = pneg %p59
      $region26: #{_custom_conv2d_linear.1} parent=23 // pred_check_branch
        %187 = sbr.rel (%p185) target = $region28
      $region27: #{_custom_conv2d_linear.1} parent=23 // pred_region
        %s188 = smul.u32 5, %s19
        %s189 = smul.u32 2, %s18
        %p190 = scmp.lt.s32.totalorder %s16, 1
        %s191 = scalar_select %p190, %s16, 1
        %p192 = scmp.lt.s32.totalorder %s188, 4
        %s193 = scalar_select %p192, %s188, 4
        %p194 = scmp.lt.s32.totalorder %s189, 1
        %s195 = scalar_select %p194, %s189, 1
        %s196 = smul.addr %s193, 2
        %s197 = sadd.s32 %s195, %s196
        %s198 = smul.addr %s191, 10
        %s199 = sadd.s32 %s197, %s198
        %s200 = smul.addr %s199, 8
        %s201 = scalar_lea.vmem %s0, %s200
        %s202 = smul.u32 5, %s19
        %s203 = smul.u32 2, %s18
      $region28: #{_custom_conv2d_linear.1} parent=23 // pred_fallthru
        _
    $region24: #{_custom_conv2d_linear.1} parent=5 // pred_fallthru
      _
    %p204 = scmp.le.s32.totalorder 1, %s9
    %p205 = scmp.lt.s32.totalorder %s9, 3
    %p206 = pnand %p204, %p205
    %p207 = pneg %p206
    // Predicated region
    $region29: #{_custom_conv2d_linear.1} parent=5 // pred_check
      _
    $region30: #{_custom_conv2d_linear.1} parent=5 // pred_check_branch
      %209 = sbr.rel (%p206) target = $region32
    $region31: #{_custom_conv2d_linear.1} parent=5 // pred_region
      %s210 = ssub.s32 %s9, 1
      %s211 = smul.u32 5, %s23
      %s212 = smul.u32 2, %s22
      %p213 = scmp.lt.s32.totalorder %s20, 1
      %s214 = scalar_select %p213, %s20, 1
      %p215 = scmp.lt.s32.totalorder %s211, 4
      %s216 = scalar_select %p215, %s211, 4
      %p217 = scmp.lt.s32.totalorder %s212, 1
      %s218 = scalar_select %p217, %s212, 1
      %s219 = smul.addr %s216, 2
      %s220 = sadd.s32 %s218, %s219
      %s221 = smul.addr %s214, 10
      %s222 = sadd.s32 %s220, %s221
      %s223 = smul.addr %s222, 8
      %s224 = scalar_lea.vmem %s0, %s223
      %p225 = pneg %p65
      %p226 = pneg %p62
      %p227 = scmp.lt.s32.totalorder %s21, 0
      %s228 = scalar_select %p227, %s21, 0
      %p229 = scmp.lt.s32.totalorder %s23, 0
      %s230 = scalar_select %p229, %s23, 0
      %s231 = sadd.s32 %s230, %s228
      %s232 = smul.addr %s231, 8
      %s233 = scalar_lea.vmem %s1, %s232
      %p234 = pneg %p93
      %p235 = pneg %p90
      %p236 = scmp.lt.s32.totalorder %s21, 0
      %s237 = scalar_select %p236, %s21, 0
      %s238 = smul.addr %s237, 8
      %s239 = scalar_lea.vmem %s2, %s238
      %p240 = pneg %p119
      %p241 = pneg %p116
      %p242 = pneg %p149
      %p243 = pneg %p146
      %s244 = smul.u32 2, %s22
      %p245 = scmp.lt.s32.totalorder %s20, 1
      %s246 = scalar_select %p245, %s20, 1
      %p247 = scmp.lt.s32.totalorder %s21, 0
      %s248 = scalar_select %p247, %s21, 0
      %p249 = scmp.lt.s32.totalorder %s244, 1
      %s250 = scalar_select %p249, %s244, 1
      %s251 = smul.addr %s248, 2
      %s252 = sadd.s32 %s250, %s251
      %s253 = smul.addr %s246, 2
      %s254 = sadd.s32 %s252, %s253
      %s255 = smul.addr %s254, 8
      %s256 = scalar_lea.vmem %s3, %s255
      %s257 = smul.u32 5, %s23
      %s258 = smul.u32 2, %s22
      %p259 = scmp.lt.s32.totalorder %s20, 1
      %s260 = scalar_select %p259, %s20, 1
      %p261 = scmp.lt.s32.totalorder %s257, 4
      %s262 = scalar_select %p261, %s257, 4
      %p263 = scmp.lt.s32.totalorder %s258, 1
      %s264 = scalar_select %p263, %s258, 1
      %s265 = smul.addr %s262, 2
      %s266 = sadd.s32 %s264, %s265
      %s267 = smul.addr %s260, 10
      %s268 = sadd.s32 %s266, %s267
      %s269 = smul.addr %s268, 8
      %s270 = scalar_lea.vmem %s0, %s269
      %s271 = smul.u32 5, %s23
      %s272 = smul.u32 2, %s22
      %p273 = scmp.lt.s32.totalorder %s21, 0
      %s274 = scalar_select %p273, %s21, 0
      %p275 = scmp.lt.s32.totalorder %s23, 0
      %s276 = scalar_select %p275, %s23, 0
      %s277 = sadd.s32 %s276, %s274
      %s278 = smul.addr %s277, 8
      %s279 = scalar_lea.vmem %s1, %s278
      %p280 = scmp.lt.s32.totalorder %s21, 0
      %s281 = scalar_select %p280, %s21, 0
      %s282 = smul.addr %s281, 8
      %s283 = scalar_lea.vmem %s2, %s282
      %s284 = smul.u32 2, %s22
      %p285 = scmp.lt.s32.totalorder %s20, 1
      %s286 = scalar_select %p285, %s20, 1
      %p287 = scmp.lt.s32.totalorder %s21, 0
      %s288 = scalar_select %p287, %s21, 0
      %p289 = scmp.lt.s32.totalorder %s284, 1
      %s290 = scalar_select %p289, %s284, 1
      %s291 = smul.addr %s288, 2
      %s292 = sadd.s32 %s290, %s291
      %s293 = smul.addr %s286, 2
      %s294 = sadd.s32 %s292, %s293
      %s295 = smul.addr %s294, 8
      %s296 = scalar_lea.vmem %s3, %s295
      %s297 = smul.u32 2, %s22
      %p298 = scmp.eq.s32.totalorder %s23, 0
      // Predicated region
      $region33: #{_custom_conv2d_linear.1} parent=31 // pred_check
        %p299 = pneg %p298
      $region34: #{_custom_conv2d_linear.1} parent=31 // pred_check_branch
        %301 = sbr.rel (%p299) target = $region36
      $region35: #{_custom_conv2d_linear.1} parent=31 // pred_region
        %v302 = vld [vmem:[%s283] sm:$0xff]
        %304 = vset.pattern.permute.xlu0 0
        %305 = vperm.xlu0 %304, %v302
        %v306 = vpop.permute.xlu0 %305
        %308 = vst [vmem:[%s296] sm:$0xff] %v306
        %309 = vst [vmem:[%s296 + $0x8] sm:$0xff] %v306
      $region36: #{_custom_conv2d_linear.1} parent=31 // pred_fallthru
        _
      %v310 = vld [vmem:[%s296] sm:$0xff]
      %v311 = vld [vmem:[%s296 + $0x8] sm:$0xff]
      %v312 = vld [vmem:[%s279] sm:$0xff]
      %v313 = vld [vmem:[%s270] sm:$0xff]
      %v314 = vld [vmem:[%s270 + $0x8] sm:$0xff]
      %v315 = vld [vmem:[%s270 + $0x10] sm:$0xff]
      %v316 = vld [vmem:[%s270 + $0x18] sm:$0xff]
      %v317 = vld [vmem:[%s270 + $0x20] sm:$0xff]
      %v318 = vld [vmem:[%s270 + $0x28] sm:$0xff]
      %v319 = vld [vmem:[%s270 + $0x30] sm:$0xff]
      %v320 = vld [vmem:[%s270 + $0x38] sm:$0xff]
      %v321 = vld [vmem:[%s270 + $0x40] sm:$0xff]
      %v322 = vld [vmem:[%s270 + $0x48] sm:$0xff]
      %vm323 = vcmask 326656
      %v325 = vsel %vm323, %v312, 0
      %327 = vmatpush.msra.mxu0 0.0
      %328 = vmatpush.msra.mxu0 0.0
      %329 = vmatpush.msra.mxu0 0.0
      %330 = vmatpush.msra.mxu0 0.0
      %331 = vmatpush.msra.mxu0 0.0
      %332 = vmatpush.msra.mxu0 0.0
      %333 = vmatpush.msra.mxu0 0.0
      %334 = vmatpush.msra.mxu0 0.0
      %335 = vmatpush.msra.mxu0 0.0
      %336 = vmatpush.msra.mxu0 0.0
      %337 = vmatpush.msra.mxu0 0.0
      %v338 = vand.u32 %v321, 4294901760
      %339 = vmatpush.msra.mxu0 %v338
      %v340 = vand.u32 %v319, 4294901760
      %341 = vmatpush.msra.mxu0 %v340
      %v342 = vand.u32 %v317, 4294901760
      %343 = vmatpush.msra.mxu0 %v342
      %v344 = vand.u32 %v315, 4294901760
      %345 = vmatpush.msra.mxu0 %v344
      %v346 = vand.u32 %v313, 4294901760
      %347 = vmatpush.msra.mxu0 %v346
      %v348 = vand.u32 %v325, 4294901760
      %v349 = vsub.f32 %v325, %v348
      %v350 = vand.u32 %v349, 4294901760
      %v351 = vsub.f32 %v349, %v350
      %v352 = vand.u32 %v351, 4294901760
      %353 = vmatmul.f32.gmra.mxu0 %v352
      %v354 = vpop.f32.mrf.mxu0
      %v355 = vadd.f32 0.0, %v354
      %356 = vdwg.mxu0
      %357 = vmatpush.msra.mxu0 0.0
      %358 = vmatpush.msra.mxu0 0.0
      %359 = vmatpush.msra.mxu0 0.0
      %360 = vmatpush.msra.mxu0 0.0
      %361 = vmatpush.msra.mxu0 0.0
      %362 = vmatpush.msra.mxu0 0.0
      %363 = vmatpush.msra.mxu0 0.0
      %364 = vmatpush.msra.mxu0 0.0
      %365 = vmatpush.msra.mxu0 0.0
      %366 = vmatpush.msra.mxu0 0.0
      %367 = vmatpush.msra.mxu0 0.0
      %v368 = vand.u32 %v321, 4294901760
      %v369 = vsub.f32 %v321, %v368
      %v370 = vand.u32 %v369, 4294901760
      %v371 = vsub.f32 %v369, %v370
      %v372 = vand.u32 %v371, 4294901760
      %373 = vmatpush.msra.mxu0 %v372
      %v374 = vand.u32 %v319, 4294901760
      %v375 = vsub.f32 %v319, %v374
      %v376 = vand.u32 %v375, 4294901760
      %v377 = vsub.f32 %v375, %v376
      %v378 = vand.u32 %v377, 4294901760
      %379 = vmatpush.msra.mxu0 %v378
      %v380 = vand.u32 %v317, 4294901760
      %v381 = vsub.f32 %v317, %v380
      %v382 = vand.u32 %v381, 4294901760
      %v383 = vsub.f32 %v381, %v382
      %v384 = vand.u32 %v383, 4294901760
      %385 = vmatpush.msra.mxu0 %v384
      %v386 = vand.u32 %v315, 4294901760
      %v387 = vsub.f32 %v315, %v386
      %v388 = vand.u32 %v387, 4294901760
      %v389 = vsub.f32 %v387, %v388
      %v390 = vand.u32 %v389, 4294901760
      %391 = vmatpush.msra.mxu0 %v390
      %v392 = vand.u32 %v313, 4294901760
      %v393 = vsub.f32 %v313, %v392
      %v394 = vand.u32 %v393, 4294901760
      %v395 = vsub.f32 %v393, %v394
      %v396 = vand.u32 %v395, 4294901760
      %397 = vmatpush.msra.mxu0 %v396
      %v398 = vand.u32 %v325, 4294901760
      %399 = vmatmul.f32.gmra.mxu0 %v398
      %v400 = vpop.f32.mrf.mxu0
      %v401 = vadd.f32 %v355, %v400
      %402 = vdwg.mxu0
      %403 = vmatpush.msra.mxu0 0.0
      %404 = vmatpush.msra.mxu0 0.0
      %405 = vmatpush.msra.mxu0 0.0
      %406 = vmatpush.msra.mxu0 0.0
      %407 = vmatpush.msra.mxu0 0.0
      %408 = vmatpush.msra.mxu0 0.0
      %409 = vmatpush.msra.mxu0 0.0
      %410 = vmatpush.msra.mxu0 0.0
      %411 = vmatpush.msra.mxu0 0.0
      %412 = vmatpush.msra.mxu0 0.0
      %413 = vmatpush.msra.mxu0 0.0
      %v414 = vand.u32 %v321, 4294901760
      %v415 = vsub.f32 %v321, %v414
      %416 = vmatpush.msra.mxu0 %v415
      %v417 = vand.u32 %v319, 4294901760
      %v418 = vsub.f32 %v319, %v417
      %419 = vmatpush.msra.mxu0 %v418
      %v420 = vand.u32 %v317, 4294901760
      %v421 = vsub.f32 %v317, %v420
      %422 = vmatpush.msra.mxu0 %v421
      %v423 = vand.u32 %v315, 4294901760
      %v424 = vsub.f32 %v315, %v423
      %425 = vmatpush.msra.mxu0 %v424
      %v426 = vand.u32 %v313, 4294901760
      %v427 = vsub.f32 %v313, %v426
      %428 = vmatpush.msra.mxu0 %v427
      %v429 = vand.u32 %v325, 4294901760
      %v430 = vsub.f32 %v325, %v429
      %431 = vmatmul.f32.gmra.mxu0 %v430
      %v432 = vpop.f32.mrf.mxu0
      %v433 = vadd.f32 %v401, %v432
      %434 = vdwg.mxu0
      %435 = vmatpush.msra.mxu0 0.0
      %436 = vmatpush.msra.mxu0 0.0
      %437 = vmatpush.msra.mxu0 0.0
      %438 = vmatpush.msra.mxu0 0.0
      %439 = vmatpush.msra.mxu0 0.0
      %440 = vmatpush.msra.mxu0 0.0
      %441 = vmatpush.msra.mxu0 0.0
      %442 = vmatpush.msra.mxu0 0.0
      %443 = vmatpush.msra.mxu0 0.0
      %444 = vmatpush.msra.mxu0 0.0
      %445 = vmatpush.msra.mxu0 0.0
      %v446 = vand.u32 %v321, 4294901760
      %447 = vmatpush.msra.mxu0 %v446
      %v448 = vand.u32 %v319, 4294901760
      %449 = vmatpush.msra.mxu0 %v448
      %v450 = vand.u32 %v317, 4294901760
      %451 = vmatpush.msra.mxu0 %v450
      %v452 = vand.u32 %v315, 4294901760
      %453 = vmatpush.msra.mxu0 %v452
      %v454 = vand.u32 %v313, 4294901760
      %455 = vmatpush.msra.mxu0 %v454
      %v456 = vand.u32 %v325, 4294901760
      %v457 = vsub.f32 %v325, %v456
      %v458 = vand.u32 %v457, 4294901760
      %459 = vmatmul.f32.gmra.mxu0 %v458
      %v460 = vpop.f32.mrf.mxu0
      %v461 = vadd.f32 %v433, %v460
      %462 = vdwg.mxu0
      %463 = vmatpush.msra.mxu0 0.0
      %464 = vmatpush.msra.mxu0 0.0
      %465 = vmatpush.msra.mxu0 0.0
      %466 = vmatpush.msra.mxu0 0.0
      %467 = vmatpush.msra.mxu0 0.0
      %468 = vmatpush.msra.mxu0 0.0
      %469 = vmatpush.msra.mxu0 0.0
      %470 = vmatpush.msra.mxu0 0.0
      %471 = vmatpush.msra.mxu0 0.0
      %472 = vmatpush.msra.mxu0 0.0
      %473 = vmatpush.msra.mxu0 0.0
      %v474 = vand.u32 %v321, 4294901760
      %v475 = vsub.f32 %v321, %v474
      %v476 = vand.u32 %v475, 4294901760
      %477 = vmatpush.msra.mxu0 %v476
      %v478 = vand.u32 %v319, 4294901760
      %v479 = vsub.f32 %v319, %v478
      %v480 = vand.u32 %v479, 4294901760
      %481 = vmatpush.msra.mxu0 %v480
      %v482 = vand.u32 %v317, 4294901760
      %v483 = vsub.f32 %v317, %v482
      %v484 = vand.u32 %v483, 4294901760
      %485 = vmatpush.msra.mxu0 %v484
      %v486 = vand.u32 %v315, 4294901760
      %v487 = vsub.f32 %v315, %v486
      %v488 = vand.u32 %v487, 4294901760
      %489 = vmatpush.msra.mxu0 %v488
      %v490 = vand.u32 %v313, 4294901760
      %v491 = vsub.f32 %v313, %v490
      %v492 = vand.u32 %v491, 4294901760
      %493 = vmatpush.msra.mxu0 %v492
      %v494 = vand.u32 %v325, 4294901760
      %495 = vmatmul.f32.gmra.mxu0 %v494
      %v496 = vpop.f32.mrf.mxu0
      %v497 = vadd.f32 %v461, %v496
      %498 = vdwg.mxu0
      %499 = vmatpush.msra.mxu0 0.0
      %500 = vmatpush.msra.mxu0 0.0
      %501 = vmatpush.msra.mxu0 0.0
      %502 = vmatpush.msra.mxu0 0.0
      %503 = vmatpush.msra.mxu0 0.0
      %504 = vmatpush.msra.mxu0 0.0
      %505 = vmatpush.msra.mxu0 0.0
      %506 = vmatpush.msra.mxu0 0.0
      %507 = vmatpush.msra.mxu0 0.0
      %508 = vmatpush.msra.mxu0 0.0
      %509 = vmatpush.msra.mxu0 0.0
      %v510 = vand.u32 %v321, 4294901760
      %511 = vmatpush.msra.mxu0 %v510
      %v512 = vand.u32 %v319, 4294901760
      %513 = vmatpush.msra.mxu0 %v512
      %v514 = vand.u32 %v317, 4294901760
      %515 = vmatpush.msra.mxu0 %v514
      %v516 = vand.u32 %v315, 4294901760
      %517 = vmatpush.msra.mxu0 %v516
      %v518 = vand.u32 %v313, 4294901760
      %519 = vmatpush.msra.mxu0 %v518
      %v520 = vand.u32 %v325, 4294901760
      %521 = vmatmul.f32.gmra.mxu0 %v520
      %v522 = vpop.f32.mrf.mxu0
      %v523 = vadd.f32 %v497, %v522
      %524 = vdwg.mxu0
      %525 = vmatpush.msra.mxu0 0.0
      %526 = vmatpush.msra.mxu0 0.0
      %527 = vmatpush.msra.mxu0 0.0
      %528 = vmatpush.msra.mxu0 0.0
      %529 = vmatpush.msra.mxu0 0.0
      %530 = vmatpush.msra.mxu0 0.0
      %531 = vmatpush.msra.mxu0 0.0
      %532 = vmatpush.msra.mxu0 0.0
      %533 = vmatpush.msra.mxu0 0.0
      %534 = vmatpush.msra.mxu0 0.0
      %535 = vmatpush.msra.mxu0 0.0
      %v536 = vand.u32 %v322, 4294901760
      %537 = vmatpush.msra.mxu0 %v536
      %v538 = vand.u32 %v320, 4294901760
      %539 = vmatpush.msra.mxu0 %v538
      %v540 = vand.u32 %v318, 4294901760
      %541 = vmatpush.msra.mxu0 %v540
      %v542 = vand.u32 %v316, 4294901760
      %543 = vmatpush.msra.mxu0 %v542
      %v544 = vand.u32 %v314, 4294901760
      %545 = vmatpush.msra.mxu0 %v544
      %v546 = vand.u32 %v325, 4294901760
      %v547 = vsub.f32 %v325, %v546
      %v548 = vand.u32 %v547, 4294901760
      %v549 = vsub.f32 %v547, %v548
      %v550 = vand.u32 %v549, 4294901760
      %551 = vmatmul.f32.gmra.mxu0 %v550
      %v552 = vpop.f32.mrf.mxu0
      %v553 = vadd.f32 0.0, %v552
      %554 = vdwg.mxu0
      %555 = vmatpush.msra.mxu0 0.0
      %556 = vmatpush.msra.mxu0 0.0
      %557 = vmatpush.msra.mxu0 0.0
      %558 = vmatpush.msra.mxu0 0.0
      %559 = vmatpush.msra.mxu0 0.0
      %560 = vmatpush.msra.mxu0 0.0
      %561 = vmatpush.msra.mxu0 0.0
      %562 = vmatpush.msra.mxu0 0.0
      %563 = vmatpush.msra.mxu0 0.0
      %564 = vmatpush.msra.mxu0 0.0
      %565 = vmatpush.msra.mxu0 0.0
      %v566 = vand.u32 %v322, 4294901760
      %v567 = vsub.f32 %v322, %v566
      %v568 = vand.u32 %v567, 4294901760
      %v569 = vsub.f32 %v567, %v568
      %v570 = vand.u32 %v569, 4294901760
      %571 = vmatpush.msra.mxu0 %v570
      %v572 = vand.u32 %v320, 4294901760
      %v573 = vsub.f32 %v320, %v572
      %v574 = vand.u32 %v573, 4294901760
      %v575 = vsub.f32 %v573, %v574
      %v576 = vand.u32 %v575, 4294901760
      %577 = vmatpush.msra.mxu0 %v576
      %v578 = vand.u32 %v318, 4294901760
      %v579 = vsub.f32 %v318, %v578
      %v580 = vand.u32 %v579, 4294901760
      %v581 = vsub.f32 %v579, %v580
      %v582 = vand.u32 %v581, 4294901760
      %583 = vmatpush.msra.mxu0 %v582
      %v584 = vand.u32 %v316, 4294901760
      %v585 = vsub.f32 %v316, %v584
      %v586 = vand.u32 %v585, 4294901760
      %v587 = vsub.f32 %v585, %v586
      %v588 = vand.u32 %v587, 4294901760
      %589 = vmatpush.msra.mxu0 %v588
      %v590 = vand.u32 %v314, 4294901760
      %v591 = vsub.f32 %v314, %v590
      %v592 = vand.u32 %v591, 4294901760
      %v593 = vsub.f32 %v591, %v592
      %v594 = vand.u32 %v593, 4294901760
      %595 = vmatpush.msra.mxu0 %v594
      %v596 = vand.u32 %v325, 4294901760
      %597 = vmatmul.f32.gmra.mxu0 %v596
      %v598 = vpop.f32.mrf.mxu0
      %v599 = vadd.f32 %v553, %v598
      %600 = vdwg.mxu0
      %601 = vmatpush.msra.mxu0 0.0
      %602 = vmatpush.msra.mxu0 0.0
      %603 = vmatpush.msra.mxu0 0.0
      %604 = vmatpush.msra.mxu0 0.0
      %605 = vmatpush.msra.mxu0 0.0
      %606 = vmatpush.msra.mxu0 0.0
      %607 = vmatpush.msra.mxu0 0.0
      %608 = vmatpush.msra.mxu0 0.0
      %609 = vmatpush.msra.mxu0 0.0
      %610 = vmatpush.msra.mxu0 0.0
      %611 = vmatpush.msra.mxu0 0.0
      %v612 = vand.u32 %v322, 4294901760
      %v613 = vsub.f32 %v322, %v612
      %614 = vmatpush.msra.mxu0 %v613
      %v615 = vand.u32 %v320, 4294901760
      %v616 = vsub.f32 %v320, %v615
      %617 = vmatpush.msra.mxu0 %v616
      %v618 = vand.u32 %v318, 4294901760
      %v619 = vsub.f32 %v318, %v618
      %620 = vmatpush.msra.mxu0 %v619
      %v621 = vand.u32 %v316, 4294901760
      %v622 = vsub.f32 %v316, %v621
      %623 = vmatpush.msra.mxu0 %v622
      %v624 = vand.u32 %v314, 4294901760
      %v625 = vsub.f32 %v314, %v624
      %626 = vmatpush.msra.mxu0 %v625
      %v627 = vand.u32 %v325, 4294901760
      %v628 = vsub.f32 %v325, %v627
      %629 = vmatmul.f32.gmra.mxu0 %v628
      %v630 = vpop.f32.mrf.mxu0
      %v631 = vadd.f32 %v599, %v630
      %632 = vdwg.mxu0
      %633 = vmatpush.msra.mxu0 0.0
      %634 = vmatpush.msra.mxu0 0.0
      %635 = vmatpush.msra.mxu0 0.0
      %636 = vmatpush.msra.mxu0 0.0
      %637 = vmatpush.msra.mxu0 0.0
      %638 = vmatpush.msra.mxu0 0.0
      %639 = vmatpush.msra.mxu0 0.0
      %640 = vmatpush.msra.mxu0 0.0
      %641 = vmatpush.msra.mxu0 0.0
      %642 = vmatpush.msra.mxu0 0.0
      %643 = vmatpush.msra.mxu0 0.0
      %v644 = vand.u32 %v322, 4294901760
      %645 = vmatpush.msra.mxu0 %v644
      %v646 = vand.u32 %v320, 4294901760
      %647 = vmatpush.msra.mxu0 %v646
      %v648 = vand.u32 %v318, 4294901760
      %649 = vmatpush.msra.mxu0 %v648
      %v650 = vand.u32 %v316, 4294901760
      %651 = vmatpush.msra.mxu0 %v650
      %v652 = vand.u32 %v314, 4294901760
      %653 = vmatpush.msra.mxu0 %v652
      %v654 = vand.u32 %v325, 4294901760
      %v655 = vsub.f32 %v325, %v654
      %v656 = vand.u32 %v655, 4294901760
      %657 = vmatmul.f32.gmra.mxu0 %v656
      %v658 = vpop.f32.mrf.mxu0
      %v659 = vadd.f32 %v631, %v658
      %660 = vdwg.mxu0
      %661 = vmatpush.msra.mxu0 0.0
      %662 = vmatpush.msra.mxu0 0.0
      %663 = vmatpush.msra.mxu0 0.0
      %664 = vmatpush.msra.mxu0 0.0
      %665 = vmatpush.msra.mxu0 0.0
      %666 = vmatpush.msra.mxu0 0.0
      %667 = vmatpush.msra.mxu0 0.0
      %668 = vmatpush.msra.mxu0 0.0
      %669 = vmatpush.msra.mxu0 0.0
      %670 = vmatpush.msra.mxu0 0.0
      %671 = vmatpush.msra.mxu0 0.0
      %v672 = vand.u32 %v322, 4294901760
      %v673 = vsub.f32 %v322, %v672
      %v674 = vand.u32 %v673, 4294901760
      %675 = vmatpush.msra.mxu0 %v674
      %v676 = vand.u32 %v320, 4294901760
      %v677 = vsub.f32 %v320, %v676
      %v678 = vand.u32 %v677, 4294901760
      %679 = vmatpush.msra.mxu0 %v678
      %v680 = vand.u32 %v318, 4294901760
      %v681 = vsub.f32 %v318, %v680
      %v682 = vand.u32 %v681, 4294901760
      %683 = vmatpush.msra.mxu0 %v682
      %v684 = vand.u32 %v316, 4294901760
      %v685 = vsub.f32 %v316, %v684
      %v686 = vand.u32 %v685, 4294901760
      %687 = vmatpush.msra.mxu0 %v686
      %v688 = vand.u32 %v314, 4294901760
      %v689 = vsub.f32 %v314, %v688
      %v690 = vand.u32 %v689, 4294901760
      %691 = vmatpush.msra.mxu0 %v690
      %v692 = vand.u32 %v325, 4294901760
      %693 = vmatmul.f32.gmra.mxu0 %v692
      %v694 = vpop.f32.mrf.mxu0
      %v695 = vadd.f32 %v659, %v694
      %696 = vdwg.mxu0
      %697 = vmatpush.msra.mxu0 0.0
      %698 = vmatpush.msra.mxu0 0.0
      %699 = vmatpush.msra.mxu0 0.0
      %700 = vmatpush.msra.mxu0 0.0
      %701 = vmatpush.msra.mxu0 0.0
      %702 = vmatpush.msra.mxu0 0.0
      %703 = vmatpush.msra.mxu0 0.0
      %704 = vmatpush.msra.mxu0 0.0
      %705 = vmatpush.msra.mxu0 0.0
      %706 = vmatpush.msra.mxu0 0.0
      %707 = vmatpush.msra.mxu0 0.0
      %v708 = vand.u32 %v322, 4294901760
      %709 = vmatpush.msra.mxu0 %v708
      %v710 = vand.u32 %v320, 4294901760
      %711 = vmatpush.msra.mxu0 %v710
      %v712 = vand.u32 %v318, 4294901760
      %713 = vmatpush.msra.mxu0 %v712
      %v714 = vand.u32 %v316, 4294901760
      %715 = vmatpush.msra.mxu0 %v714
      %v716 = vand.u32 %v314, 4294901760
      %717 = vmatpush.msra.mxu0 %v716
      %v718 = vand.u32 %v325, 4294901760
      %719 = vmatmul.f32.gmra.mxu0 %v718
      %v720 = vpop.f32.mrf.mxu0
      %v721 = vadd.f32 %v695, %v720
      %722 = vdwg.mxu0
      %v723 = vadd.f32 %v310, %v523
      %v724 = vadd.f32 %v311, %v721
      %725 = vst [vmem:[%s296] sm:$0xff] %v723
      %726 = vst [vmem:[%s296 + $0x8] sm:$0xff] %v724
      %s727 = smul.u32 2, %s22
      %p728 = scmp.lt.s32.totalorder %s20, 1
      %s729 = scalar_select %p728, %s20, 1
      %p730 = scmp.lt.s32.totalorder %s21, 0
      %s731 = scalar_select %p730, %s21, 0
      %p732 = scmp.lt.s32.totalorder %s727, 1
      %s733 = scalar_select %p732, %s727, 1
      %s734 = smul.addr %s731, 2
      %s735 = sadd.s32 %s733, %s734
      %s736 = smul.addr %s729, 2
      %s737 = sadd.s32 %s735, %s736
      %s738 = smul.addr %s737, 8
      %s739 = scalar_lea.vmem %s3, %s738
      // Predicated region
      $region37: #{_custom_conv2d_linear.1} parent=31 // pred_check
        %p740 = pneg %p146
      $region38: #{_custom_conv2d_linear.1} parent=31 // pred_check_branch
        %742 = sbr.rel (%p740) target = $region40
      $region39: #{_custom_conv2d_linear.1} parent=31 // pred_region
        %s743 = smul.u32 2, %s22
      $region40: #{_custom_conv2d_linear.1} parent=31 // pred_fallthru
        _
    $region32: #{_custom_conv2d_linear.1} parent=5 // pred_fallthru
      _
    %p744 = scmp.le.s32.totalorder 2, %s9
    // Predicated region
    $region41: #{_custom_conv2d_linear.1} parent=5 // pred_check
      %p745 = pneg %p744
    $region42: #{_custom_conv2d_linear.1} parent=5 // pred_check_branch
      %747 = sbr.rel (%p745) target = $region44
    $region43: #{_custom_conv2d_linear.1} parent=5 // pred_region
      %s748 = ssub.s32 %s9, 2
      // Predicated region
      $region45: #{_custom_conv2d_linear.1} parent=43 // pred_check
        %p749 = pneg %p152
      $region46: #{_custom_conv2d_linear.1} parent=43 // pred_check_branch
        %751 = sbr.rel (%p749) target = $region48
      $region47: #{_custom_conv2d_linear.1} parent=43 // pred_region
        %s752 = smul.u32 2, %s26
        %p753 = scmp.lt.s32.totalorder %s24, 1
        %s754 = scalar_select %p753, %s24, 1
        %p755 = scmp.lt.s32.totalorder %s25, 0
        %s756 = scalar_select %p755, %s25, 0
        %p757 = scmp.lt.s32.totalorder %s752, 1
        %s758 = scalar_select %p757, %s752, 1
        %s759 = smul.addr %s756, 2
        %s760 = sadd.s32 %s758, %s759
        %s761 = smul.addr %s754, 2
        %s762 = sadd.s32 %s760, %s761
        %s763 = smul.addr %s762, 8
        %s764 = scalar_lea.vmem %s3, %s763
      $region48: #{_custom_conv2d_linear.1} parent=43 // pred_fallthru
        _
    $region44: #{_custom_conv2d_linear.1} parent=5 // pred_fallthru
      _
  $region6: #{_custom_conv2d_linear.1} parent=0 // loop_footer
    %s13 = sadd.s32 1, %s9
  $region7: #{_custom_conv2d_linear.1} parent=0 // loop_footer_branch
    %8 = sbr.rel target = $region3
  $region8: #{_custom_conv2d_linear.1} parent=0 // loop_exit
    _

</llo_original>
